<compile_context>
chip_gen: v7x
topology: tpu7x:2x2x1
jax: 0.10.0
libtpu: 0.0.40
codegen_flags: <defaults>
</compile_context>

<pallas_src>
import jax
import jax.numpy as jnp
from jax.experimental import pallas as pl
from jax.experimental.pallas import tpu as pltpu


def _unflatten_dma_kernel(x_hbm_ref, o_hbm_ref, sem):
    # Single whole-array HBM -> HBM DMA copy; no VMEM staging, no vld/vst.
    cp = pltpu.make_async_copy(x_hbm_ref, o_hbm_ref, sem)
    cp.start()
    cp.wait()


def unflatten(x, C=128, H=7, W=7):
    """Reproduces Unflatten.forward: x.view(N, C, H, W).

    x: (N, C*H*W) array. Returns (N, C, H, W) in the same dtype.
    """
    N, F = x.shape
    assert F == C * H * W, f"flat dim {F} != C*H*W = {C * H * W}"

    bytes_accessed = 2 * N * F * jnp.dtype(x.dtype).itemsize

    flat_out = pl.pallas_call(
        _unflatten_dma_kernel,
        out_shape=jax.ShapeDtypeStruct((N, F), x.dtype),
        # Keep both operands in HBM: no automatic HBM<->VMEM pipelining.
        in_specs=[pl.BlockSpec(memory_space=pl.ANY)],
        out_specs=pl.BlockSpec(memory_space=pl.ANY),
        scratch_shapes=[pltpu.SemaphoreType.DMA],
        cost_estimate=pl.CostEstimate(
            flops=0, transcendentals=0, bytes_accessed=bytes_accessed
        ),
    )(x)

    # Row-major reshape == torch.view on a contiguous tensor (metadata only,
    # no data movement).
    return flat_out.reshape(N, C, H, W)


if __name__ == "__main__":
    # Module defaults: C=128, H=7, W=7; small batch N=2.
    N, C, H, W = 2, 128, 7, 7
    key = jax.random.PRNGKey(0)
    x = jax.random.normal(key, (N, C * H * W), dtype=jnp.float32)

    out = unflatten(x, C=C, H=H, W=W)
    out = jax.block_until_ready(out)

    # Sanity check against the pure-JAX reference of torch's view semantics.
    ref = x.reshape(N, C, H, W)
    assert out.shape == (N, C, H, W)
    assert out.dtype == x.dtype
    assert bool(jnp.array_equal(out, ref))

    print("KERNEL_OK")
</pallas_src>

<mosaic_0001>
module attributes {stable_mosaic.version = 11 : i64} {
  func.func @_unflatten_dma_kernel(%arg0: memref<2x6272xf32, #tpu.memory_space<any>>, %arg1: memref<2x6272xf32, #tpu.memory_space<any>>, %arg2: memref<!tpu.dma_semaphore, #tpu.memory_space<semaphore_mem>>) attributes {dimension_semantics = [], scalar_prefetch = 0 : i64, scratch_operands = 1 : i64, tpu.core_type = #tpu.core_type<tc>} {
    tpu.enqueue_dma source(%arg0 : memref<2x6272xf32, #tpu.memory_space<any>>) target(%arg1 : memref<2x6272xf32, #tpu.memory_space<any>>) target_semaphore(%arg2 : memref<!tpu.dma_semaphore, #tpu.memory_space<semaphore_mem>>)
    tpu.wait_dma2 semaphore(%arg2 : memref<!tpu.dma_semaphore, #tpu.memory_space<semaphore_mem>>) src(%arg0 : memref<2x6272xf32, #tpu.memory_space<any>>) dst(%arg1 : memref<2x6272xf32, #tpu.memory_space<any>>)
    return
  }
}

</mosaic_0001>

<llo_original>
// kernel: tpu_custom_call.1
$region0: #{tpu_custom_call.1}
  #allocation0 [shape = 'u32[]', space=smem, size = 0x4, offset = 0x4, fixed_abs, tag = 'smem constant byte address 0x4 - core index']
  #allocation1 [shape = 'u32[144,128]{1,0:T(1,128)}', space=vmem, size = 0x12000, scoped, tag = 'internal scratch']
  #allocation2 [shape = 's32[1]{0}', space=sflag, size = 0x4, scoped, tag = 'scratch operand']
  #allocation3 [shape = 's32[]', space=sflag, size = 0x4, offset = 0, fixed_abs, tag = 'sflag constant byte address 0x0 - dummy sync flag']
  #allocation4 [shape = 'u32[0]{0}', space=smem, size = 0, offset = 0, fixed_abs, tag = 'smem constant byte address 0x0 - null']
  %s0 = inlined_call_operand.hbm [shape: f32[2,6272], index: 0, kind: input, shape index: {}]
  %s1 = inlined_call_operand.hbm [shape: f32[2,6272], index: 1, kind: output, shape index: {}]
  %s2 = sld [smem:[#allocation0]]
  $region2: #{tpu_custom_call.1} parent=0
    _
  %s4 = ssub.s32 1, %s2
  %s5 = scalar_select 0, %s4, %s2
  %s7 = sshll.u32 1, 14
  %s8 = sxor.u32 4294967295, %s7
  %s11 = sshll.u32 3, 24
  %s12 = sxor.u32 4294967295, %s11
  %s13 = sand.u32 0, %s12
  %s15 = sor.u32 %s13, 0
  %18 = dma.general %s0, 1568, %s1, [#allocation2], [#allocation3], [#allocation4], %s15, 0
  %s19 = smul.u32 2, 1
  %s20 = smul.u32 %s19, 49
  %s21 = sshll.u32 %s20, 4
  %22 = dma.done [#allocation2], %s21
  %23 = vsyncmov [#allocation2]
  %s24 = vpop.sfrf %23
  %p25 = scmp.eq.s32.totalorder %s24, 0
  %p26 = pneg %p25
  %28 = shalt.err (%p26)

</llo_original>
